<compile_context>
chip_gen: v6e
topology: v6e:2x2x1
jax: 0.10.0
libtpu: 0.0.40
codegen_flags: <defaults>
</compile_context>

<pallas_src>
import jax
import jax.numpy as jnp
from jax.experimental import pallas as pl
from jax.experimental.pallas import tpu as pltpu

_MIB = 1024 * 1024


def _spatial_attention_kernel(params_ref, x_ref, o_ref):
    # params_ref: SMEM, shape (3,) float32 -> [w_avg / C, w_max, bias]
    # x_ref:      VMEM, shape (1, C, TS) in native dtype
    # o_ref:      VMEM, shape (1, 1, TS)
    x = x_ref[...]                                                    # (1, C, TS)
    sum_pool = jnp.sum(x, axis=1, keepdims=True, dtype=jnp.float32)   # (1, 1, TS)
    max_pool = jnp.max(x, axis=1, keepdims=True).astype(jnp.float32)  # (1, 1, TS)

    att = params_ref[0] * sum_pool + params_ref[1] * max_pool + params_ref[2]
    o_ref[...] = jax.nn.sigmoid(att).astype(o_ref.dtype)


def _vmem_capacity_bytes():
    """Per-TensorCore VMEM capacity; conservative fallback if unqueryable."""
    try:
        info = pltpu.get_tpu_info()
        cap = int(getattr(info, "vmem_capacity_bytes", 0) or 0)
        if cap > 0:
            return cap
    except Exception:
        pass
    return 64 * _MIB  # conservative: v7x per-core VMEM


def _sublane_pack(dtype):
    # f32 -> 8, bf16 -> 16, int8/fp8 -> 32 rows per physical (.,128) tile.
    return max(8, 32 // jnp.dtype(dtype).itemsize)


def _pick_spatial_tile(hw, c, dtype, target_bytes):
    """Largest lane-dense (multiple-of-128) spatial tile whose *sublane-padded*
    VMEM footprint stays under target_bytes.  No divisibility requirement:
    the caller uses a cdiv grid and Pallas masks the ragged last block."""
    if hw < 128:
        return hw  # block == full dim is always a legal layout
    itemsize = jnp.dtype(dtype).itemsize
    pack = _sublane_pack(dtype)
    c_padded = -(-c // pack) * pack
    bytes_per_col = c_padded * 128 * itemsize      # one 128-lane column, padded C
    max_cols = max(1, target_bytes // bytes_per_col)
    cols = min(int(max_cols), hw // 128)
    return 128 * cols


def spatial_attention(x, conv_weight, conv_bias):
    """x: (B, C, H, W); conv_weight: (1, 2, 1, 1); conv_bias: (1,).

    Returns sigmoid(w0 * mean_c(x) + w1 * max_c(x) + b), shape (B, 1, H, W).
    (PyTorch concatenates [avg, max] along dim=1, so weight[...,0] multiplies
    the average and weight[...,1] the max.)
    """
    B, C, H, W = x.shape
    HW = H * W
    dtype = x.dtype
    itemsize = jnp.dtype(dtype).itemsize
    pack = _sublane_pack(dtype)
    c_padded = -(-C // pack) * pack

    vmem_cap = _vmem_capacity_bytes()
    # Per-block DMA target: ~1/8 of per-core VMEM (v5e/v6e: 16 MiB, v7x: 8 MiB).
    target_bytes = max(2 * _MIB, vmem_cap // 8)
    TS = _pick_spatial_tile(HW, C, dtype, target_bytes)

    # v7x has 2 TensorCores sharing the grid: guarantee >= 4 grid points when
    # the batch is tiny (vmem_cap <= 64 MiB is the multi-TC proxy; no-op on
    # single-TC v5e/v6e so their tiles stay large).
    maybe_multi_tc = vmem_cap <= 64 * _MIB
    if maybe_multi_tc and HW >= 128:
        if B * pl.cdiv(HW, TS) < 4:
            want_tiles = -(-4 // B)
            ts_cap = max(128, 128 * (HW // (128 * want_tiles)))
            TS = min(TS, ts_cap)

    S = pl.cdiv(HW, TS)

    # Fold 1/C into the avg weight; keep all three scalars in SMEM.
    w = conv_weight.reshape(2).astype(jnp.float32)
    params = jnp.stack(
        [w[0] / C, w[1], conv_bias.reshape(()).astype(jnp.float32)]
    )  # (3,)

    # Lane-dense layout: flatten the spatial dims.
    x_flat = x.reshape(B, C, HW)

    # Explicit scoped-VMEM budget: double-buffered padded input block +
    # double-buffered padded output block + slack, clamped to 3/4 of physical.
    in_block_bytes = c_padded * TS * itemsize
    out_block_bytes = pack * TS * itemsize
    vmem_limit = 2 * in_block_bytes + 2 * out_block_bytes + 4 * _MIB
    vmem_limit = int(min(max(vmem_limit, 16 * _MIB), (vmem_cap * 3) // 4))

    cost = pl.CostEstimate(
        flops=2 * B * C * HW + 6 * B * HW,          # sum + max compares + affine
        transcendentals=B * HW,                      # sigmoid exp
        bytes_accessed=B * C * HW * itemsize + B * HW * itemsize + 3 * 4,
    )

    out_flat = pl.pallas_call(
        _spatial_attention_kernel,
        out_shape=jax.ShapeDtypeStruct((B, 1, HW), dtype),
        grid=(B, S),
        in_specs=[
            pl.BlockSpec(memory_space=pltpu.MemorySpace.SMEM),     # params
            pl.BlockSpec((1, C, TS), lambda b, s: (b, 0, s)),      # x tile
        ],
        out_specs=pl.BlockSpec((1, 1, TS), lambda b, s: (b, 0, s)),
        compiler_params=pltpu.CompilerParams(
            dimension_semantics=("parallel", "parallel"),
            vmem_limit_bytes=vmem_limit,
        ),
        cost_estimate=cost,
    )(params, x_flat)

    return out_flat.reshape(B, 1, H, W)


def _reference(x, conv_weight, conv_bias):
    # Pure-JAX reference matching the PyTorch forward.
    avg_pool = jnp.mean(x.astype(jnp.float32), axis=1, keepdims=True)
    max_pool = jnp.max(x.astype(jnp.float32), axis=1, keepdims=True)
    w = conv_weight.reshape(2).astype(jnp.float32)
    att = w[0] * avg_pool + w[1] * max_pool + conv_bias.reshape(())
    return jax.nn.sigmoid(att).astype(x.dtype)


if __name__ == "__main__":
    key = jax.random.PRNGKey(0)
    kx, kw, kb = jax.random.split(key, 3)

    B, C, H, W = 2, 4, 16, 16
    x = jax.random.normal(kx, (B, C, H, W), dtype=jnp.float32)

    # Deterministic "Conv2d(2, 1, kernel_size=1)" parameters.
    conv_weight = jax.random.normal(kw, (1, 2, 1, 1), dtype=jnp.float32) * 0.5
    conv_bias = jax.random.normal(kb, (1,), dtype=jnp.float32) * 0.1

    out = spatial_attention(x, conv_weight, conv_bias)
    out = jax.block_until_ready(out)

    ref = _reference(x, conv_weight, conv_bias)
    assert out.shape == (B, 1, H, W)
    assert jnp.allclose(out, ref, atol=1e-5, rtol=1e-5)

    print("KERNEL_OK")
</pallas_src>

<mosaic_0001>
module attributes {stable_mosaic.version = 11 : i64} {
  func.func @_spatial_attention_kernel(%arg0: i32, %arg1: i32, %arg2: memref<3xf32, #tpu.memory_space<smem>>, %arg3: memref<1x4x128xf32, #tpu.memory_space<vmem>>, %arg4: memref<1x1x128xf32, #tpu.memory_space<vmem>>) attributes {dimension_semantics = [#tpu.dimension_semantics<parallel>, #tpu.dimension_semantics<parallel>], iteration_bounds = array<i64: 2, 2>, scalar_prefetch = 0 : i64, scratch_operands = 0 : i64, tpu.core_type = #tpu.core_type<tc>, window_params = [{transform_indices = @transform_0, window_bounds = array<i64: 3>}, {transform_indices = @transform_1, window_bounds = array<i64: 1, 4, 128>}, {transform_indices = @transform_2, window_bounds = array<i64: 1, 1, 128>}]} {
    %c0 = arith.constant 0 : index
    %c0_0 = arith.constant 0 : index
    %c0_1 = arith.constant 0 : index
    %0 = vector.load %arg3[%c0, %c0_0, %c0_1] : memref<1x4x128xf32, #tpu.memory_space<vmem>>, vector<1x4x128xf32>
    %cst = arith.constant dense<0.000000e+00> : vector<1x128xf32>
    %1 = vector.multi_reduction <add>, %0, %cst [1] : vector<1x4x128xf32> to vector<1x128xf32>
    %2 = vector.shape_cast %1 : vector<1x128xf32> to vector<1x1x128xf32>
    %cst_2 = arith.constant dense<0xFF800000> : vector<1x128xf32>
    %3 = vector.multi_reduction <maximumf>, %0, %cst_2 [1] : vector<1x4x128xf32> to vector<1x128xf32>
    %4 = vector.shape_cast %3 : vector<1x128xf32> to vector<1x1x128xf32>
    %c0_3 = arith.constant 0 : index
    %5 = memref.load %arg2[%c0_3] : memref<3xf32, #tpu.memory_space<smem>>
    %6 = vector.broadcast %5 : f32 to vector<1x1x128xf32>
    %7 = arith.mulf %6, %2 : vector<1x1x128xf32>
    %c1 = arith.constant 1 : index
    %8 = memref.load %arg2[%c1] : memref<3xf32, #tpu.memory_space<smem>>
    %9 = vector.broadcast %8 : f32 to vector<1x1x128xf32>
    %10 = arith.mulf %9, %4 : vector<1x1x128xf32>
    %11 = arith.addf %7, %10 : vector<1x1x128xf32>
    %c2 = arith.constant 2 : index
    %12 = memref.load %arg2[%c2] : memref<3xf32, #tpu.memory_space<smem>>
    %13 = vector.broadcast %12 : f32 to vector<1x1x128xf32>
    %14 = arith.addf %11, %13 : vector<1x1x128xf32>
    %15 = arith.negf %14 : vector<1x1x128xf32>
    %16 = math.exp %15 : vector<1x1x128xf32>
    %cst_4 = arith.constant 1.000000e+00 : f32
    %17 = vector.broadcast %cst_4 : f32 to vector<1x1x128xf32>
    %18 = arith.addf %17, %16 : vector<1x1x128xf32>
    %19 = arith.divf %17, %18 : vector<1x1x128xf32>
    %c0_5 = arith.constant 0 : index
    %c0_6 = arith.constant 0 : index
    %c0_7 = arith.constant 0 : index
    %20 = vector.load %arg4[%c0_5, %c0_6, %c0_7] : memref<1x1x128xf32, #tpu.memory_space<vmem>>, vector<1x1x128xf32>
    tpu.vector_store %arg4[%c0_5, %c0_6, %c0_7], %19 {strides = array<i32>} : memref<1x1x128xf32, #tpu.memory_space<vmem>>, vector<1x1x128xf32>,
    return
  }
  func.func @transform_0(%arg0: i32, %arg1: i32) -> i32 {
    %c0_i32 = arith.constant 0 : i32
    %c0_i32_0 = arith.constant 0 : i32
    return %c0_i32 : i32
  }
  func.func @transform_1(%arg0: i32, %arg1: i32) -> (i32, i32, i32) {
    %c0_i32 = arith.constant 0 : i32
    %c0_i32_0 = arith.constant 0 : i32
    return %arg0, %c0_i32, %arg1 : i32, i32, i32
  }
  func.func @transform_2(%arg0: i32, %arg1: i32) -> (i32, i32, i32) {
    %c0_i32 = arith.constant 0 : i32
    %c0_i32_0 = arith.constant 0 : i32
    return %arg0, %c0_i32, %arg1 : i32, i32, i32
  }
}

</mosaic_0001>

<llo_original>
// kernel: tpu_custom_call.1
$region0: #{tpu_custom_call.1}
  #allocation0 [shape = 'u32[]', space=smem, size = 0x4, offset = 0x4, fixed_abs, tag = 'smem constant byte address 0x4 - core index']
  #allocation1 [shape = 'u32[144,128]{1,0:T(1,128)}', space=vmem, size = 0x12000, scoped, tag = 'internal scratch']
  %s0 = inlined_call_operand.hbm [shape: f32[3], index: 0, kind: input, shape index: {}]
  %s1 = inlined_call_operand.hbm [shape: f32[2,4,256], index: 1, kind: input, shape index: {}]
  %s2 = inlined_call_operand.hbm [shape: f32[2,1,256], index: 2, kind: output, shape index: {}]
  %s3 = sld [smem:[#allocation0]]
  $region49: #{tpu_custom_call.1} parent=0
    _
  %s5 = ssub.s32 1, %s3
  %s6 = scalar_select 0, %s5, %s3
  $region1: #{tpu_custom_call.1} parent=0
    #allocation2 [shape = 'u8[512]{0}', space=smem, size = 0x200, scoped, tag = 'input window, operand 0, single buffered']
    #allocation3 [shape = 's32[2]{0}', space=sflag, size = 0x8, scoped, tag = 'scoped memory for tpu_custom_call.1']
    #allocation4 [shape = 's32[2]{0}', space=sflag, size = 0x8, scoped, tag = 'scoped memory for tpu_custom_call.1']
    #allocation5 [shape = 's32[2]{0}', space=sflag, size = 0x8, scoped, tag = 'scoped memory for tpu_custom_call.1']
    #allocation6 [shape = 'u8[4096]{0}', space=vmem, size = 0x1000, scoped, tag = 'input window, operand 1']
    #allocation7 [shape = 'u8[1024]{0}', space=vmem, size = 0x400, scoped, tag = 'output window, operand 0']
    %7 = vsyncpa [#allocation5], 0
    %8 = vsyncpa [#allocation3], 0
    %s9 = scalar_lea.sflag [#allocation3], 1
    %10 = vsyncpa %s9, 0
    %11 = vsyncpa [#allocation4], 0
    %s12 = scalar_lea.sflag [#allocation4], 1
    %13 = vsyncpa %s12, 0
    loop: start=0, step=1, limit=6
    $region2: #{tpu_custom_call.1} parent=1 // loop_pre_header
      _
    $region3: #{tpu_custom_call.1} parent=1 // loop_header
      %s15 = sphi 0, %s19
      %p16 = scmp.ge.s32.totalorder %s15, 6
      %s22 = sphi 0, %s34
      %s23 = sphi 0, %s30
      %s24 = sphi 0, %s22
      %s25 = sphi 0, %s23
      %s26 = sphi 0, %s24
      %s27 = sphi 0, %s25
      %s35 = sphi 0, %s35
      %s37 = sphi 0, %s35
      %s38 = sphi 0, %s37
      %s52 = sphi 0, %s38
      %s60 = sphi 0, %s62
      %s63 = sphi 0, %s60
      %s64 = sphi 0, %s63
      %s80 = sphi 0, %s64
      %s88 = sphi 0, %s90
      %s91 = sphi 0, %s88
      %s92 = sphi 0, %s91
      %s108 = sphi 0, %s92
    $region4: #{tpu_custom_call.1} parent=1 // loop_header_branch
      %18 = sbr.rel (%p16) target = $region8
    $region5: #{tpu_custom_call.1} parent=1 // loop_body
      %s20 = ssub.s32 %s15, 1
      %s21 = ssub.s32 %s15, 2
      %s28 = sadd.s32 1, %s23
      %p29 = scmp.ge.s32.totalorder %s28, 2
      %s30 = scalar_select %p29, 0, %s28
      %s31 = sadd.s32 1, %s22
      %s32 = scalar_select %p29, %s31, %s22
      %p33 = scmp.ge.s32.totalorder %s32, 2
      %s34 = scalar_select %p33, 0, %s32
      %s36 = sadd.s32 %s35, 1
      %p39 = scmp.eq.s32.totalorder %s15, 3
      %p40 = scmp.ne.s32.totalorder %s35, %s37
      %p41 = scmp.eq.s32.totalorder %s15, 0
      %p42 = por %p40, %p41
      %p43 = scmp.ne.s32.totalorder %s35, %s37
      %p44 = scmp.eq.s32.totalorder %s20, 3
      %p45 = por %p43, %p44
      %p46 = scmp.ne.s32.totalorder %s37, %s38
      %p47 = scmp.eq.s32.totalorder %s20, 0
      %p48 = por %p46, %p47
      %p49 = scmp.ne.s32.totalorder %s37, %s38
      %p50 = scmp.eq.s32.totalorder %s21, 3
      %p51 = por %p49, %p50
      %p53 = scmp.ne.s32.totalorder %s38, %s52
      %p54 = scmp.eq.s32.totalorder %s21, 0
      %p55 = por %p53, %p54
      %s56 = ssub.s32 %s22, %s34
      %s57 = ssub.s32 %s23, %s30
      %s58 = sor.u32 %s56, %s57
      %p59 = scmp.eq.s32.totalorder %s58, 0
      %s61 = sadd.s32 %s60, 1
      %s62 = scalar_select %p59, %s60, %s61
      %p65 = pneg %p59
      %p66 = scmp.eq.s32.totalorder %s15, 3
      %p67 = por %p65, %p66
      %p68 = scmp.ne.s32.totalorder %s60, %s63
      %p69 = scmp.eq.s32.totalorder %s15, 0
      %p70 = por %p68, %p69
      %p71 = scmp.ne.s32.totalorder %s60, %s63
      %p72 = scmp.eq.s32.totalorder %s20, 3
      %p73 = por %p71, %p72
      %p74 = scmp.ne.s32.totalorder %s63, %s64
      %p75 = scmp.eq.s32.totalorder %s20, 0
      %p76 = por %p74, %p75
      %p77 = scmp.ne.s32.totalorder %s63, %s64
      %p78 = scmp.eq.s32.totalorder %s21, 3
      %p79 = por %p77, %p78
      %p81 = scmp.ne.s32.totalorder %s64, %s80
      %p82 = scmp.eq.s32.totalorder %s21, 0
      %p83 = por %p81, %p82
      %s84 = ssub.s32 %s22, %s34
      %s85 = ssub.s32 %s23, %s30
      %s86 = sor.u32 %s84, %s85
      %p87 = scmp.eq.s32.totalorder %s86, 0
      %s89 = sadd.s32 %s88, 1
      %s90 = scalar_select %p87, %s88, %s89
      %p93 = pneg %p87
      %p94 = scmp.eq.s32.totalorder %s15, 3
      %p95 = por %p93, %p94
      %p96 = scmp.ne.s32.totalorder %s88, %s91
      %p97 = scmp.eq.s32.totalorder %s15, 0
      %p98 = por %p96, %p97
      %p99 = scmp.ne.s32.totalorder %s88, %s91
      %p100 = scmp.eq.s32.totalorder %s20, 3
      %p101 = por %p99, %p100
      %p102 = scmp.ne.s32.totalorder %s91, %s92
      %p103 = scmp.eq.s32.totalorder %s20, 0
      %p104 = por %p102, %p103
      %p105 = scmp.ne.s32.totalorder %s91, %s92
      %p106 = scmp.eq.s32.totalorder %s21, 3
      %p107 = por %p105, %p106
      %p109 = scmp.ne.s32.totalorder %s92, %s108
      %p110 = scmp.eq.s32.totalorder %s21, 0
      %p111 = por %p109, %p110
      %p112 = scmp.le.s32.totalorder 1, %s15
      %p113 = scmp.lt.s32.totalorder %s15, 5
      %p114 = pnand %p112, %p113
      %p115 = pneg %p114
      // Predicated region
      $region9: #{tpu_custom_call.1} parent=5 // pred_check
        _
      $region10: #{tpu_custom_call.1} parent=5 // pred_check_branch
        %117 = sbr.rel (%p114) target = $region12
      $region11: #{tpu_custom_call.1} parent=5 // pred_region
        %s118 = ssub.s32 %s15, 1
        // Predicated region
        $region13: #{tpu_custom_call.1} parent=11 // pred_check
          %p119 = pneg %p48
        $region14: #{tpu_custom_call.1} parent=11 // pred_check_branch
          %121 = sbr.rel (%p119) target = $region16
        $region15: #{tpu_custom_call.1} parent=11 // pred_region
          %s123 = ssub.s32 16, 16
          %124 = vsyncadd [#allocation5], %s123
          %127 = dma.hbm_to_smem %s0, 16, [#allocation2], [#allocation5]
        $region16: #{tpu_custom_call.1} parent=11 // pred_fallthru
          _
      $region12: #{tpu_custom_call.1} parent=5 // pred_fallthru
        _
      %p128 = scmp.lt.s32.totalorder %s15, 4
      // Predicated region
      $region17: #{tpu_custom_call.1} parent=5 // pred_check
        %p129 = pneg %p128
      $region18: #{tpu_custom_call.1} parent=5 // pred_check_branch
        %131 = sbr.rel (%p129) target = $region20
      $region19: #{tpu_custom_call.1} parent=5 // pred_region
        // Predicated region
        $region21: #{tpu_custom_call.1} parent=19 // pred_check
          %p132 = pneg %p70
        $region22: #{tpu_custom_call.1} parent=19 // pred_check_branch
          %134 = sbr.rel (%p132) target = $region24
        $region23: #{tpu_custom_call.1} parent=19 // pred_region
          %s135 = sand.u32 %s60, 1
          %s136 = scalar_lea.sflag [#allocation3], %s135
          %s137 = sand.u32 %s60, 1
          %s138 = smul.addr %s137, 4
          %s139 = scalar_lea.vmem [#allocation6], %s138
          %s141 = ssub.s32 64, 64
          %142 = vsyncadd %s136, %s141
          %s143 = smul.addr %s22, 2
          %s144 = sadd.s32 %s23, %s143
          %s145 = smul.addr %s144, 64
          %s146 = scalar_lea.hbm %s1, %s145
          %s148 = sshll.u32 %s139, 4
          %s149 = int_to_ptr.vmem [resolvable:$true] %s148
          %151 = dma.hbm_to_vmem [thread:$0]  %s146, 64, %s149, %s136
        $region24: #{tpu_custom_call.1} parent=19 // pred_fallthru
          _
      $region20: #{tpu_custom_call.1} parent=5 // pred_fallthru
        _
      %p152 = scmp.le.s32.totalorder 1, %s15
      %p153 = scmp.lt.s32.totalorder %s15, 5
      %p154 = pnand %p152, %p153
      %p155 = pneg %p154
      // Predicated region
      $region25: #{tpu_custom_call.1} parent=5 // pred_check
        _
      $region26: #{tpu_custom_call.1} parent=5 // pred_check_branch
        %157 = sbr.rel (%p154) target = $region28
      $region27: #{tpu_custom_call.1} parent=5 // pred_region
        %s158 = ssub.s32 %s15, 1
        // Predicated region
        $region29: #{tpu_custom_call.1} parent=27 // pred_check
          %p159 = pneg %p48
        $region30: #{tpu_custom_call.1} parent=27 // pred_check_branch
          %161 = sbr.rel (%p159) target = $region32
        $region31: #{tpu_custom_call.1} parent=27 // pred_region
          %162 = dma.done [#allocation5], 16
        $region32: #{tpu_custom_call.1} parent=27 // pred_fallthru
          _
        %s163 = sand.u32 %s63, 1
        %s164 = scalar_lea.sflag [#allocation3], %s163
        %s165 = sand.u32 %s63, 1
        %s166 = smul.addr %s165, 4
        %s167 = scalar_lea.vmem [#allocation6], %s166
        // Predicated region
        $region33: #{tpu_custom_call.1} parent=27 // pred_check
          %p168 = pneg %p76
        $region34: #{tpu_custom_call.1} parent=27 // pred_check_branch
          %170 = sbr.rel (%p168) target = $region36
        $region35: #{tpu_custom_call.1} parent=27 // pred_region
          %171 = dma.done %s164, 64
        $region36: #{tpu_custom_call.1} parent=27 // pred_fallthru
          _
        %172 = sfence
        %p173 = pneg %p48
        %p174 = pneg %p45
        %s175 = sand.u32 %s63, 1
        %s176 = scalar_lea.sflag [#allocation3], %s175
        %s177 = sand.u32 %s63, 1
        %s178 = smul.addr %s177, 4
        %s179 = scalar_lea.vmem [#allocation6], %s178
        %p180 = pneg %p76
        %p181 = pneg %p73
        %p182 = pneg %p104
        %p183 = pneg %p101
        %s184 = sand.u32 %s91, 1
        %s185 = scalar_lea.sflag [#allocation4], %s184
        %s186 = sand.u32 %s91, 1
        %s187 = scalar_lea.vmem [#allocation7], %s186
        %v188 = vld [vmem:[%s167] sm:$0xf]
        %vm189 = vcmask 1043456
        %v190 = vsel %vm189, %v188, 0.0
        %v191 = vrot.slane %v190, 4
        %v192 = vadd.f32 %v190, %v191
        %v193 = vrot.slane %v192, 2
        %v194 = vadd.f32 %v192, %v193
        %v195 = vrot.slane %v194, 1
        %v196 = vadd.f32 %v194, %v195
        %v197 = vsel %vm189, %v188, -inf
        %v198 = vrot.slane %v197, 4
        %v199 = vmax.f32 %v197, %v198
        %v200 = vrot.slane %v199, 2
        %v201 = vmax.f32 %v199, %v200
        %v202 = vrot.slane %v201, 1
        %v203 = vmax.f32 %v201, %v202
        %s204 = sld [smem:[#allocation2]]
        %v205 = vstv %s204
        %v206 = vmul.f32 %v205, %v196
        %s207 = sld [smem:[#allocation2 + $0x1]]
        %v208 = vstv %s207
        %v209 = vmul.f32 %v208, %v203
        %v210 = vadd.f32 %v206, %v209
        %s211 = sld [smem:[#allocation2 + $0x2]]
        %v212 = vstv %s211
        %v213 = vadd.f32 %v210, %v212
        %v214 = vxor.u32 %v213, 2147483648
        %v215 = vmul.f32 %v214, 1.442695
        %v216 = vpow.pop %v215
        %v217 = vadd.f32 %v216, 1.0
        %v218 = vrcp.pop %v217
        %v219 = vmul.f32 1.0, %v218
        %220 = vst [vmem:[%s187] sm:$0x1] %v219
        %s221 = sand.u32 %s91, 1
        %s222 = scalar_lea.sflag [#allocation4], %s221
        %s223 = sand.u32 %s91, 1
        %s224 = scalar_lea.vmem [#allocation7], %s223
        // Predicated region
        $region37: #{tpu_custom_call.1} parent=27 // pred_check
          %p225 = pneg %p101
        $region38: #{tpu_custom_call.1} parent=27 // pred_check_branch
          %227 = sbr.rel (%p225) target = $region40
        $region39: #{tpu_custom_call.1} parent=27 // pred_region
          %s229 = ssub.s32 16, 16
          %230 = vsyncadd %s222, %s229
          %s231 = smul.addr %s24, 2
          %s232 = sadd.s32 %s25, %s231
          %s233 = smul.addr %s232, 16
          %s234 = scalar_lea.hbm %s2, %s233
          %s236 = sshll.u32 %s224, 4
          %s237 = int_to_ptr.vmem [resolvable:$true] %s236
          %239 = dma.vmem_to_hbm [thread:$0]  %s237, 16, %s234, %s222
        $region40: #{tpu_custom_call.1} parent=27 // pred_fallthru
          _
      $region28: #{tpu_custom_call.1} parent=5 // pred_fallthru
        _
      %p240 = scmp.le.s32.totalorder 2, %s15
      // Predicated region
      $region41: #{tpu_custom_call.1} parent=5 // pred_check
        %p241 = pneg %p240
      $region42: #{tpu_custom_call.1} parent=5 // pred_check_branch
        %243 = sbr.rel (%p241) target = $region44
      $region43: #{tpu_custom_call.1} parent=5 // pred_region
        %s244 = ssub.s32 %s15, 2
        // Predicated region
        $region45: #{tpu_custom_call.1} parent=43 // pred_check
          %p245 = pneg %p107
        $region46: #{tpu_custom_call.1} parent=43 // pred_check_branch
          %247 = sbr.rel (%p245) target = $region48
        $region47: #{tpu_custom_call.1} parent=43 // pred_region
          %s248 = sand.u32 %s92, 1
          %s249 = scalar_lea.sflag [#allocation4], %s248
          %s250 = sand.u32 %s92, 1
          %s251 = scalar_lea.vmem [#allocation7], %s250
          %252 = dma.done %s249, 16
        $region48: #{tpu_custom_call.1} parent=43 // pred_fallthru
          _
      $region44: #{tpu_custom_call.1} parent=5 // pred_fallthru
        _
    $region6: #{tpu_custom_call.1} parent=1 // loop_footer
      %s19 = sadd.s32 1, %s15
    $region7: #{tpu_custom_call.1} parent=1 // loop_footer_branch
      %14 = sbr.rel target = $region3
    $region8: #{tpu_custom_call.1} parent=1 // loop_exit
      _
    %253 = vsyncpa [#allocation3], 1
    %s254 = scalar_lea.sflag [#allocation3], 1
    %255 = vsyncpa %s254, 1
    %256 = vsyncpa [#allocation4], 1
    %s257 = scalar_lea.sflag [#allocation4], 1
    %258 = vsyncpa %s257, 1
    %259 = vsyncpa [#allocation5], 1
    %s260 = scalar_lea.sflag [#allocation5], 1
    %261 = vsyncpa %s260, 1

</llo_original>
